<compile_context>
chip_gen: v7x
topology: tpu7x:2x2x1
jax: 0.10.0
libtpu: 0.0.40
codegen_flags: <defaults>
</compile_context>

<pallas_src>
import numpy as np

import jax
import jax.numpy as jnp
from jax import lax
from jax.experimental import pallas as pl
from jax.experimental.pallas import tpu as pltpu


def _pair(v):
    return (v, v) if isinstance(v, int) else tuple(v)


def _round_up(x, m):
    return ((x + m - 1) // m) * m


def _cdiv(a, b):
    return (a + b - 1) // b


def _plan(N, C, Ho1, Wo1, kh, kw, dh, dw, usable_vmem):
    """Pick band height R_out and lane-segment count G (all static Python)."""
    haloH = (kh - 1) * dh
    haloW = (kw - 1) * dw
    W_seg = Wo1 + haloW                       # == W + 2*pw for stride-1 math
    budget = max(usable_vmem - (2 << 20), 2 << 20)
    best = None
    for R_out in (8, 16, 24, 32, 40, 48, 56, 64):
        T = min(R_out, Ho1)                   # usable output rows per slot
        R_in = R_out + haloH                  # stored input rows per slot
        n_tiles = _cdiv(Ho1, T)
        S = N * n_tiles                       # total (image, row-tile) slots
        # target ~1 MiB of input per grid step, at least one segment
        g_bytes = max(1, (1 << 20) // max(1, 4 * C * R_in * W_seg))
        G = max(1, min(S, g_bytes))

        def step_bytes(g):
            lp = _round_up(g * W_seg, 128)
            return 2 * 4 * lp * (C * R_in + R_out), lp   # double-buffered in+out

        bytes_, L_pad = step_bytes(G)
        while G > 1 and bytes_ > budget:      # shrink to fit the VMEM budget
            G -= 1
            bytes_, L_pad = step_bytes(G)
        fits = 0 if bytes_ <= budget else 1
        num_bands = _cdiv(S, G)
        traffic = num_bands * L_pad * (C * R_in + R_out)
        key = (fits, traffic, R_out)
        if best is None or key < best[0]:
            best = (key, dict(R_out=R_out, R_in=R_in, T=T, n_tiles=n_tiles,
                              S=S, G=G, L_pad=L_pad, num_bands=num_bands,
                              W_seg=W_seg, step_bytes=bytes_))
    return best[1]


def _make_sc_conv_kernel(C, kh, kw, dh, dw, R_out, L_pad, unroll_c):
    KK = kh * kw

    def kernel(x_ref, w_ref, b_ref, o_ref):
        # x_ref: (1, C, R_in, L_pad) VMEM   (R_in = R_out + (kh-1)*dh)
        # w_ref: (C*kh*kw,) SMEM, b_ref: (1,) SMEM
        # o_ref: (1, R_out, L_pad) VMEM     (sublane/lane dense, unmasked vst)
        def chan(c, acc):
            for ki in range(kh):
                # one sublane-offset slab load per (c, ki) ...
                slab = x_ref[0, c, pl.ds(ki * dh, R_out), :]
                for kj in range(kw):
                    # ... kw lane-shifted taps generated on the XLU (roll),
                    # segment packing guarantees valid lanes never wrap.
                    tap = slab if kj == 0 else pltpu.roll(
                        slab, (L_pad - kj * dw) % L_pad, axis=1)
                    acc = acc + w_ref[c * KK + ki * kw + kj] * tap   # VPU FMA
            return acc

        acc = jnp.zeros((R_out, L_pad), jnp.float32) + b_ref[0]
        if unroll_c:
            for c in range(C):
                acc = chan(c, acc)
        else:
            acc = lax.fori_loop(0, C, chan, acc)
        o_ref[0] = acc

    return kernel


def sc_conv_forward(x, weight, bias, *, stride, padding, dilation):
    """Forward of sc_conv.

    x:      (N, C, H, W)   float32, NCHW (same as PyTorch)
    weight: (1, C, kh, kw) float32
    bias:   (1,)           float32
    returns (N, 1, Ho, Wo) float32
    """
    N, C, H, W = x.shape
    _, wC, kh, kw = weight.shape
    assert wC == C
    sh, sw = _pair(stride)
    ph, pw = _pair(padding)
    dh, dw = _pair(dilation)

    haloH = (kh - 1) * dh
    haloW = (kw - 1) * dw
    Ho1 = H + 2 * ph - haloH            # stride-1 output extents
    Wo1 = W + 2 * pw - haloW
    assert Ho1 >= 1 and Wo1 >= 1, "kernel/dilation larger than padded input"
    Ho = (Ho1 - 1) // sh + 1            # Conv2d's strided output extents
    Wo = (Wo1 - 1) // sw + 1
    assert (Ho - 1) * sh <= Ho1 - 1 and (Wo - 1) * sw <= Wo1 - 1

    # ---- static tiling plan (VMEM budget from the actual chip) -------------
    try:
        info = pltpu.get_tpu_info()
        vmem_cap = int(getattr(info, "vmem_capacity_bytes", 64 << 20))
    except Exception:
        vmem_cap = 64 << 20
    usable = (vmem_cap * 3) // 4        # ~48 MiB v7x, ~96 MiB v5e/v6e
    plan = _plan(N, C, Ho1, Wo1, kh, kw, dh, dw, usable)
    R_out, R_in, T = plan["R_out"], plan["R_in"], plan["T"]
    G, L_pad, num_bands = plan["G"], plan["L_pad"], plan["num_bands"]
    n_tiles, S, W_seg = plan["n_tiles"], plan["S"], plan["W_seg"]
    S_total = num_bands * G

    # ---- halo-only zero padding (no lane inflation) -------------------------
    H_rows = max(H + 2 * ph, R_in)      # a few extra zero rows iff Ho1 < R_out
    x_halo = jnp.pad(x.astype(jnp.float32),
                     ((0, 0), (0, 0), (ph, H_rows - H - ph), (pw, pw)))

    # ---- static slot tables: slot = (image, output-row-tile) ----------------
    s = np.arange(S_total)
    img = np.where(s < S, s // n_tiles, 0).astype(np.int32)
    tile = np.where(s < S, s % n_tiles, 0).astype(np.int32)
    row0 = np.minimum(tile * T, max(Ho1 - T, 0)).astype(np.int32)
    assert int(row0.max()) + R_in <= H_rows

    # ---- pack: each band = G lane segments of W_seg cols x R_in rows --------
    def _grab(n, r0):
        return lax.dynamic_slice(x_halo, (n, 0, r0, 0), (1, C, R_in, W_seg))[0]

    slots = jax.vmap(_grab)(jnp.asarray(img), jnp.asarray(row0))  # (S_tot,C,R_in,W_seg)
    packed = slots.reshape(num_bands, G, C, R_in, W_seg)
    packed = packed.transpose(0, 2, 3, 1, 4).reshape(num_bands, C, R_in, G * W_seg)
    if L_pad > G * W_seg:
        packed = jnp.pad(packed, ((0, 0), (0, 0), (0, 0), (0, L_pad - G * W_seg)))

    K = C * kh * kw
    w_flat = weight.reshape(K).astype(jnp.float32)     # (c, ki, kj) order
    b_flat = bias.reshape(1).astype(jnp.float32)

    kernel = _make_sc_conv_kernel(C, kh, kw, dh, dw, R_out, L_pad,
                                  unroll_c=(C * kh * kw <= 96))

    vmem_limit = int(max(min(usable, plan["step_bytes"] + (4 << 20)), 8 << 20))

    out_packed = pl.pallas_call(
        kernel,
        out_shape=jax.ShapeDtypeStruct((num_bands, R_out, L_pad), jnp.float32),
        grid=(num_bands,),
        in_specs=[
            pl.BlockSpec((1, C, R_in, L_pad), lambda b: (b, 0, 0, 0)),
            pl.BlockSpec(memory_space=pltpu.MemorySpace.SMEM),   # weights
            pl.BlockSpec(memory_space=pltpu.MemorySpace.SMEM),   # bias
        ],
        out_specs=pl.BlockSpec((1, R_out, L_pad), lambda b: (b, 0, 0)),
        compiler_params=pltpu.CompilerParams(
            dimension_semantics=("parallel",),
            vmem_limit_bytes=vmem_limit),
        cost_estimate=pl.CostEstimate(
            flops=2 * num_bands * R_out * L_pad * K,
            bytes_accessed=4 * (num_bands * (C * R_in + R_out) * L_pad + K + 1),
            transcendentals=0),
    )(packed, w_flat, b_flat)

    # ---- unpack (cheap: operates on the small, lane-packed output) ----------
    o = out_packed[:, :, :G * W_seg].reshape(num_bands, R_out, G, W_seg)
    o = o.transpose(0, 2, 1, 3).reshape(S_total, R_out, W_seg)[:, :, :Wo1]

    oi = np.arange(Ho1)
    t_of = np.minimum(oi // T, n_tiles - 1)
    r0_of = np.minimum(t_of * T, max(Ho1 - T, 0))
    slot_idx = (np.arange(N)[:, None] * n_tiles + t_of[None, :]).astype(np.int32)
    r_idx = np.broadcast_to((oi - r0_of).astype(np.int32), (N, Ho1))
    out1 = o[jnp.asarray(slot_idx), jnp.asarray(r_idx), :]          # (N, Ho1, Wo1)

    # TODO(synk): stride>1 computes the stride-1 result and decimates; a
    # phase-decomposed packing (stride folded off the lane axis in the wrapper)
    # would avoid the sh*sw overcompute.
    if sh > 1 or sw > 1:
        out1 = out1[:, ::sh, ::sw][:, :Ho, :Wo]
    return out1[:, None, :, :]                                      # (N,1,Ho,Wo)


if __name__ == "__main__":
    # sc_conv(in_ch=4, out_ch=1, kernel_size=3, stride=1, padding=1, dilation=1)
    in_ch, kh, kw = 4, 3, 3
    stride, padding, dilation = 1, 1, 1
    N, H, W = 2, 16, 16

    key = jax.random.PRNGKey(0)
    kx, kw_, kb = jax.random.split(key, 3)

    x = jax.random.normal(kx, (N, in_ch, H, W), dtype=jnp.float32)
    fan_in = in_ch * kh * kw
    bound = 1.0 / float(fan_in) ** 0.5
    weight = jax.random.uniform(kw_, (1, in_ch, kh, kw),
                                minval=-bound, maxval=bound, dtype=jnp.float32)
    bias = jax.random.uniform(kb, (1,), minval=-bound, maxval=bound,
                              dtype=jnp.float32)

    out = sc_conv_forward(x, weight, bias,
                          stride=stride, padding=padding, dilation=dilation)
    out = jax.block_until_ready(out)

    # sanity check against XLA's conv
    ref = jax.lax.conv_general_dilated(
        x, weight, window_strides=(stride, stride),
        padding=[(padding, padding), (padding, padding)],
        rhs_dilation=(dilation, dilation),
        dimension_numbers=("NCHW", "OIHW", "NCHW")) + bias.reshape(1, 1, 1, 1)

    assert out.shape == ref.shape, (out.shape, ref.shape)
    assert jnp.allclose(out, ref, atol=1e-4, rtol=1e-4), float(
        jnp.max(jnp.abs(out - ref)))

    print("KERNEL_OK")
</pallas_src>

<mosaic_0001>
module attributes {stable_mosaic.version = 11 : i64} {
  func.func @kernel(%arg0: i32, %arg1: memref<1x4x10x128xf32, #tpu.memory_space<vmem>>, %arg2: memref<36xf32, #tpu.memory_space<smem>>, %arg3: memref<1xf32, #tpu.memory_space<smem>>, %arg4: memref<1x8x128xf32, #tpu.memory_space<vmem>>) attributes {dimension_semantics = [#tpu.dimension_semantics<parallel>], iteration_bounds = array<i64: 1>, scalar_prefetch = 0 : i64, scratch_operands = 0 : i64, tpu.core_type = #tpu.core_type<tc>, window_params = [{transform_indices = @transform_0, window_bounds = array<i64: 1, 4, 10, 128>}, {transform_indices = @transform_1, window_bounds = array<i64: 36>}, {transform_indices = @transform_2, window_bounds = array<i64: 1>}, {transform_indices = @transform_3, window_bounds = array<i64: 1, 8, 128>}]} {
    %cst = arith.constant 0.000000e+00 : f32
    %0 = vector.broadcast %cst : f32 to vector<8x128xf32>
    %c0 = arith.constant 0 : index
    %1 = memref.load %arg3[%c0] : memref<1xf32, #tpu.memory_space<smem>>
    %2 = vector.broadcast %1 : f32 to vector<8x128xf32>
    %3 = arith.addf %0, %2 : vector<8x128xf32>
    %c0_0 = arith.constant 0 : index
    %c0_1 = arith.constant 0 : index
    %c0_2 = arith.constant 0 : index
    %c0_3 = arith.constant 0 : index
    %4 = vector.load %arg1[%c0_0, %c0_1, %c0_2, %c0_3] : memref<1x4x10x128xf32, #tpu.memory_space<vmem>>, vector<1x1x8x128xf32>
    %5 = vector.shape_cast %4 : vector<1x1x8x128xf32> to vector<8x128xf32>
    %c0_4 = arith.constant 0 : index
    %6 = memref.load %arg2[%c0_4] : memref<36xf32, #tpu.memory_space<smem>>
    %7 = vector.broadcast %6 : f32 to vector<8x128xf32>
    %8 = arith.mulf %7, %5 : vector<8x128xf32>
    %9 = arith.addf %3, %8 : vector<8x128xf32>
    %c127_i32 = arith.constant 127 : i32
    %10 = tpu.dynamic_rotate %5 by %c127_i32 dim 1 : vector<8x128xf32>, i32 -> vector<8x128xf32>
    %c1 = arith.constant 1 : index
    %11 = memref.load %arg2[%c1] : memref<36xf32, #tpu.memory_space<smem>>
    %12 = vector.broadcast %11 : f32 to vector<8x128xf32>
    %13 = arith.mulf %12, %10 : vector<8x128xf32>
    %14 = arith.addf %9, %13 : vector<8x128xf32>
    %c126_i32 = arith.constant 126 : i32
    %15 = tpu.dynamic_rotate %5 by %c126_i32 dim 1 : vector<8x128xf32>, i32 -> vector<8x128xf32>
    %c2 = arith.constant 2 : index
    %16 = memref.load %arg2[%c2] : memref<36xf32, #tpu.memory_space<smem>>
    %17 = vector.broadcast %16 : f32 to vector<8x128xf32>
    %18 = arith.mulf %17, %15 : vector<8x128xf32>
    %19 = arith.addf %14, %18 : vector<8x128xf32>
    %c0_5 = arith.constant 0 : index
    %c0_6 = arith.constant 0 : index
    %c1_7 = arith.constant 1 : index
    %c0_8 = arith.constant 0 : index
    %20 = vector.load %arg1[%c0_5, %c0_6, %c1_7, %c0_8] : memref<1x4x10x128xf32, #tpu.memory_space<vmem>>, vector<1x1x8x128xf32>
    %21 = vector.shape_cast %20 : vector<1x1x8x128xf32> to vector<8x128xf32>
    %c3 = arith.constant 3 : index
    %22 = memref.load %arg2[%c3] : memref<36xf32, #tpu.memory_space<smem>>
    %23 = vector.broadcast %22 : f32 to vector<8x128xf32>
    %24 = arith.mulf %23, %21 : vector<8x128xf32>
    %25 = arith.addf %19, %24 : vector<8x128xf32>
    %c127_i32_9 = arith.constant 127 : i32
    %26 = tpu.dynamic_rotate %21 by %c127_i32_9 dim 1 : vector<8x128xf32>, i32 -> vector<8x128xf32>
    %c4 = arith.constant 4 : index
    %27 = memref.load %arg2[%c4] : memref<36xf32, #tpu.memory_space<smem>>
    %28 = vector.broadcast %27 : f32 to vector<8x128xf32>
    %29 = arith.mulf %28, %26 : vector<8x128xf32>
    %30 = arith.addf %25, %29 : vector<8x128xf32>
    %c126_i32_10 = arith.constant 126 : i32
    %31 = tpu.dynamic_rotate %21 by %c126_i32_10 dim 1 : vector<8x128xf32>, i32 -> vector<8x128xf32>
    %c5 = arith.constant 5 : index
    %32 = memref.load %arg2[%c5] : memref<36xf32, #tpu.memory_space<smem>>
    %33 = vector.broadcast %32 : f32 to vector<8x128xf32>
    %34 = arith.mulf %33, %31 : vector<8x128xf32>
    %35 = arith.addf %30, %34 : vector<8x128xf32>
    %c0_11 = arith.constant 0 : index
    %c0_12 = arith.constant 0 : index
    %c2_13 = arith.constant 2 : index
    %c0_14 = arith.constant 0 : index
    %36 = vector.load %arg1[%c0_11, %c0_12, %c2_13, %c0_14] : memref<1x4x10x128xf32, #tpu.memory_space<vmem>>, vector<1x1x8x128xf32>
    %37 = vector.shape_cast %36 : vector<1x1x8x128xf32> to vector<8x128xf32>
    %c6 = arith.constant 6 : index
    %38 = memref.load %arg2[%c6] : memref<36xf32, #tpu.memory_space<smem>>
    %39 = vector.broadcast %38 : f32 to vector<8x128xf32>
    %40 = arith.mulf %39, %37 : vector<8x128xf32>
    %41 = arith.addf %35, %40 : vector<8x128xf32>
    %c127_i32_15 = arith.constant 127 : i32
    %42 = tpu.dynamic_rotate %37 by %c127_i32_15 dim 1 : vector<8x128xf32>, i32 -> vector<8x128xf32>
    %c7 = arith.constant 7 : index
    %43 = memref.load %arg2[%c7] : memref<36xf32, #tpu.memory_space<smem>>
    %44 = vector.broadcast %43 : f32 to vector<8x128xf32>
    %45 = arith.mulf %44, %42 : vector<8x128xf32>
    %46 = arith.addf %41, %45 : vector<8x128xf32>
    %c126_i32_16 = arith.constant 126 : i32
    %47 = tpu.dynamic_rotate %37 by %c126_i32_16 dim 1 : vector<8x128xf32>, i32 -> vector<8x128xf32>
    %c8 = arith.constant 8 : index
    %48 = memref.load %arg2[%c8] : memref<36xf32, #tpu.memory_space<smem>>
    %49 = vector.broadcast %48 : f32 to vector<8x128xf32>
    %50 = arith.mulf %49, %47 : vector<8x128xf32>
    %51 = arith.addf %46, %50 : vector<8x128xf32>
    %c0_17 = arith.constant 0 : index
    %c1_18 = arith.constant 1 : index
    %c0_19 = arith.constant 0 : index
    %c0_20 = arith.constant 0 : index
    %52 = vector.load %arg1[%c0_17, %c1_18, %c0_19, %c0_20] : memref<1x4x10x128xf32, #tpu.memory_space<vmem>>, vector<1x1x8x128xf32>
    %53 = vector.shape_cast %52 : vector<1x1x8x128xf32> to vector<8x128xf32>
    %c9 = arith.constant 9 : index
    %54 = memref.load %arg2[%c9] : memref<36xf32, #tpu.memory_space<smem>>
    %55 = vector.broadcast %54 : f32 to vector<8x128xf32>
    %56 = arith.mulf %55, %53 : vector<8x128xf32>
    %57 = arith.addf %51, %56 : vector<8x128xf32>
    %c127_i32_21 = arith.constant 127 : i32
    %58 = tpu.dynamic_rotate %53 by %c127_i32_21 dim 1 : vector<8x128xf32>, i32 -> vector<8x128xf32>
    %c10 = arith.constant 10 : index
    %59 = memref.load %arg2[%c10] : memref<36xf32, #tpu.memory_space<smem>>
    %60 = vector.broadcast %59 : f32 to vector<8x128xf32>
    %61 = arith.mulf %60, %58 : vector<8x128xf32>
    %62 = arith.addf %57, %61 : vector<8x128xf32>
    %c126_i32_22 = arith.constant 126 : i32
    %63 = tpu.dynamic_rotate %53 by %c126_i32_22 dim 1 : vector<8x128xf32>, i32 -> vector<8x128xf32>
    %c11 = arith.constant 11 : index
    %64 = memref.load %arg2[%c11] : memref<36xf32, #tpu.memory_space<smem>>
    %65 = vector.broadcast %64 : f32 to vector<8x128xf32>
    %66 = arith.mulf %65, %63 : vector<8x128xf32>
    %67 = arith.addf %62, %66 : vector<8x128xf32>
    %c0_23 = arith.constant 0 : index
    %c1_24 = arith.constant 1 : index
    %c1_25 = arith.constant 1 : index
    %c0_26 = arith.constant 0 : index
    %68 = vector.load %arg1[%c0_23, %c1_24, %c1_25, %c0_26] : memref<1x4x10x128xf32, #tpu.memory_space<vmem>>, vector<1x1x8x128xf32>
    %69 = vector.shape_cast %68 : vector<1x1x8x128xf32> to vector<8x128xf32>
    %c12 = arith.constant 12 : index
    %70 = memref.load %arg2[%c12] : memref<36xf32, #tpu.memory_space<smem>>
    %71 = vector.broadcast %70 : f32 to vector<8x128xf32>
    %72 = arith.mulf %71, %69 : vector<8x128xf32>
    %73 = arith.addf %67, %72 : vector<8x128xf32>
    %c127_i32_27 = arith.constant 127 : i32
    %74 = tpu.dynamic_rotate %69 by %c127_i32_27 dim 1 : vector<8x128xf32>, i32 -> vector<8x128xf32>
    %c13 = arith.constant 13 : index
    %75 = memref.load %arg2[%c13] : memref<36xf32, #tpu.memory_space<smem>>
    %76 = vector.broadcast %75 : f32 to vector<8x128xf32>
    %77 = arith.mulf %76, %74 : vector<8x128xf32>
    %78 = arith.addf %73, %77 : vector<8x128xf32>
    %c126_i32_28 = arith.constant 126 : i32
    %79 = tpu.dynamic_rotate %69 by %c126_i32_28 dim 1 : vector<8x128xf32>, i32 -> vector<8x128xf32>
    %c14 = arith.constant 14 : index
    %80 = memref.load %arg2[%c14] : memref<36xf32, #tpu.memory_space<smem>>
    %81 = vector.broadcast %80 : f32 to vector<8x128xf32>
    %82 = arith.mulf %81, %79 : vector<8x128xf32>
    %83 = arith.addf %78, %82 : vector<8x128xf32>
    %c0_29 = arith.constant 0 : index
    %c1_30 = arith.constant 1 : index
    %c2_31 = arith.constant 2 : index
    %c0_32 = arith.constant 0 : index
    %84 = vector.load %arg1[%c0_29, %c1_30, %c2_31, %c0_32] : memref<1x4x10x128xf32, #tpu.memory_space<vmem>>, vector<1x1x8x128xf32>
    %85 = vector.shape_cast %84 : vector<1x1x8x128xf32> to vector<8x128xf32>
    %c15 = arith.constant 15 : index
    %86 = memref.load %arg2[%c15] : memref<36xf32, #tpu.memory_space<smem>>
    %87 = vector.broadcast %86 : f32 to vector<8x128xf32>
    %88 = arith.mulf %87, %85 : vector<8x128xf32>
    %89 = arith.addf %83, %88 : vector<8x128xf32>
    %c127_i32_33 = arith.constant 127 : i32
    %90 = tpu.dynamic_rotate %85 by %c127_i32_33 dim 1 : vector<8x128xf32>, i32 -> vector<8x128xf32>
    %c16 = arith.constant 16 : index
    %91 = memref.load %arg2[%c16] : memref<36xf32, #tpu.memory_space<smem>>
    %92 = vector.broadcast %91 : f32 to vector<8x128xf32>
    %93 = arith.mulf %92, %90 : vector<8x128xf32>
    %94 = arith.addf %89, %93 : vector<8x128xf32>
    %c126_i32_34 = arith.constant 126 : i32
    %95 = tpu.dynamic_rotate %85 by %c126_i32_34 dim 1 : vector<8x128xf32>, i32 -> vector<8x128xf32>
    %c17 = arith.constant 17 : index
    %96 = memref.load %arg2[%c17] : memref<36xf32, #tpu.memory_space<smem>>
    %97 = vector.broadcast %96 : f32 to vector<8x128xf32>
    %98 = arith.mulf %97, %95 : vector<8x128xf32>
    %99 = arith.addf %94, %98 : vector<8x128xf32>
    %c0_35 = arith.constant 0 : index
    %c2_36 = arith.constant 2 : index
    %c0_37 = arith.constant 0 : index
    %c0_38 = arith.constant 0 : index
    %100 = vector.load %arg1[%c0_35, %c2_36, %c0_37, %c0_38] : memref<1x4x10x128xf32, #tpu.memory_space<vmem>>, vector<1x1x8x128xf32>
    %101 = vector.shape_cast %100 : vector<1x1x8x128xf32> to vector<8x128xf32>
    %c18 = arith.constant 18 : index
    %102 = memref.load %arg2[%c18] : memref<36xf32, #tpu.memory_space<smem>>
    %103 = vector.broadcast %102 : f32 to vector<8x128xf32>
    %104 = arith.mulf %103, %101 : vector<8x128xf32>
    %105 = arith.addf %99, %104 : vector<8x128xf32>
    %c127_i32_39 = arith.constant 127 : i32
    %106 = tpu.dynamic_rotate %101 by %c127_i32_39 dim 1 : vector<8x128xf32>, i32 -> vector<8x128xf32>
    %c19 = arith.constant 19 : index
    %107 = memref.load %arg2[%c19] : memref<36xf32, #tpu.memory_space<smem>>
    %108 = vector.broadcast %107 : f32 to vector<8x128xf32>
    %109 = arith.mulf %108, %106 : vector<8x128xf32>
    %110 = arith.addf %105, %109 : vector<8x128xf32>
    %c126_i32_40 = arith.constant 126 : i32
    %111 = tpu.dynamic_rotate %101 by %c126_i32_40 dim 1 : vector<8x128xf32>, i32 -> vector<8x128xf32>
    %c20 = arith.constant 20 : index
    %112 = memref.load %arg2[%c20] : memref<36xf32, #tpu.memory_space<smem>>
    %113 = vector.broadcast %112 : f32 to vector<8x128xf32>
    %114 = arith.mulf %113, %111 : vector<8x128xf32>
    %115 = arith.addf %110, %114 : vector<8x128xf32>
    %c0_41 = arith.constant 0 : index
    %c2_42 = arith.constant 2 : index
    %c1_43 = arith.constant 1 : index
    %c0_44 = arith.constant 0 : index
    %116 = vector.load %arg1[%c0_41, %c2_42, %c1_43, %c0_44] : memref<1x4x10x128xf32, #tpu.memory_space<vmem>>, vector<1x1x8x128xf32>
    %117 = vector.shape_cast %116 : vector<1x1x8x128xf32> to vector<8x128xf32>
    %c21 = arith.constant 21 : index
    %118 = memref.load %arg2[%c21] : memref<36xf32, #tpu.memory_space<smem>>
    %119 = vector.broadcast %118 : f32 to vector<8x128xf32>
    %120 = arith.mulf %119, %117 : vector<8x128xf32>
    %121 = arith.addf %115, %120 : vector<8x128xf32>
    %c127_i32_45 = arith.constant 127 : i32
    %122 = tpu.dynamic_rotate %117 by %c127_i32_45 dim 1 : vector<8x128xf32>, i32 -> vector<8x128xf32>
    %c22 = arith.constant 22 : index
    %123 = memref.load %arg2[%c22] : memref<36xf32, #tpu.memory_space<smem>>
    %124 = vector.broadcast %123 : f32 to vector<8x128xf32>
    %125 = arith.mulf %124, %122 : vector<8x128xf32>
    %126 = arith.addf %121, %125 : vector<8x128xf32>
    %c126_i32_46 = arith.constant 126 : i32
    %127 = tpu.dynamic_rotate %117 by %c126_i32_46 dim 1 : vector<8x128xf32>, i32 -> vector<8x128xf32>
    %c23 = arith.constant 23 : index
    %128 = memref.load %arg2[%c23] : memref<36xf32, #tpu.memory_space<smem>>
    %129 = vector.broadcast %128 : f32 to vector<8x128xf32>
    %130 = arith.mulf %129, %127 : vector<8x128xf32>
    %131 = arith.addf %126, %130 : vector<8x128xf32>
    %c0_47 = arith.constant 0 : index
    %c2_48 = arith.constant 2 : index
    %c2_49 = arith.constant 2 : index
    %c0_50 = arith.constant 0 : index
    %132 = vector.load %arg1[%c0_47, %c2_48, %c2_49, %c0_50] : memref<1x4x10x128xf32, #tpu.memory_space<vmem>>, vector<1x1x8x128xf32>
    %133 = vector.shape_cast %132 : vector<1x1x8x128xf32> to vector<8x128xf32>
    %c24 = arith.constant 24 : index
    %134 = memref.load %arg2[%c24] : memref<36xf32, #tpu.memory_space<smem>>
    %135 = vector.broadcast %134 : f32 to vector<8x128xf32>
    %136 = arith.mulf %135, %133 : vector<8x128xf32>
    %137 = arith.addf %131, %136 : vector<8x128xf32>
    %c127_i32_51 = arith.constant 127 : i32
    %138 = tpu.dynamic_rotate %133 by %c127_i32_51 dim 1 : vector<8x128xf32>, i32 -> vector<8x128xf32>
    %c25 = arith.constant 25 : index
    %139 = memref.load %arg2[%c25] : memref<36xf32, #tpu.memory_space<smem>>
    %140 = vector.broadcast %139 : f32 to vector<8x128xf32>
    %141 = arith.mulf %140, %138 : vector<8x128xf32>
    %142 = arith.addf %137, %141 : vector<8x128xf32>
    %c126_i32_52 = arith.constant 126 : i32
    %143 = tpu.dynamic_rotate %133 by %c126_i32_52 dim 1 : vector<8x128xf32>, i32 -> vector<8x128xf32>
    %c26 = arith.constant 26 : index
    %144 = memref.load %arg2[%c26] : memref<36xf32, #tpu.memory_space<smem>>
    %145 = vector.broadcast %144 : f32 to vector<8x128xf32>
    %146 = arith.mulf %145, %143 : vector<8x128xf32>
    %147 = arith.addf %142, %146 : vector<8x128xf32>
    %c0_53 = arith.constant 0 : index
    %c3_54 = arith.constant 3 : index
    %c0_55 = arith.constant 0 : index
    %c0_56 = arith.constant 0 : index
    %148 = vector.load %arg1[%c0_53, %c3_54, %c0_55, %c0_56] : memref<1x4x10x128xf32, #tpu.memory_space<vmem>>, vector<1x1x8x128xf32>
    %149 = vector.shape_cast %148 : vector<1x1x8x128xf32> to vector<8x128xf32>
    %c27 = arith.constant 27 : index
    %150 = memref.load %arg2[%c27] : memref<36xf32, #tpu.memory_space<smem>>
    %151 = vector.broadcast %150 : f32 to vector<8x128xf32>
    %152 = arith.mulf %151, %149 : vector<8x128xf32>
    %153 = arith.addf %147, %152 : vector<8x128xf32>
    %c127_i32_57 = arith.constant 127 : i32
    %154 = tpu.dynamic_rotate %149 by %c127_i32_57 dim 1 : vector<8x128xf32>, i32 -> vector<8x128xf32>
    %c28 = arith.constant 28 : index
    %155 = memref.load %arg2[%c28] : memref<36xf32, #tpu.memory_space<smem>>
    %156 = vector.broadcast %155 : f32 to vector<8x128xf32>
    %157 = arith.mulf %156, %154 : vector<8x128xf32>
    %158 = arith.addf %153, %157 : vector<8x128xf32>
    %c126_i32_58 = arith.constant 126 : i32
    %159 = tpu.dynamic_rotate %149 by %c126_i32_58 dim 1 : vector<8x128xf32>, i32 -> vector<8x128xf32>
    %c29 = arith.constant 29 : index
    %160 = memref.load %arg2[%c29] : memref<36xf32, #tpu.memory_space<smem>>
    %161 = vector.broadcast %160 : f32 to vector<8x128xf32>
    %162 = arith.mulf %161, %159 : vector<8x128xf32>
    %163 = arith.addf %158, %162 : vector<8x128xf32>
    %c0_59 = arith.constant 0 : index
    %c3_60 = arith.constant 3 : index
    %c1_61 = arith.constant 1 : index
    %c0_62 = arith.constant 0 : index
    %164 = vector.load %arg1[%c0_59, %c3_60, %c1_61, %c0_62] : memref<1x4x10x128xf32, #tpu.memory_space<vmem>>, vector<1x1x8x128xf32>
    %165 = vector.shape_cast %164 : vector<1x1x8x128xf32> to vector<8x128xf32>
    %c30 = arith.constant 30 : index
    %166 = memref.load %arg2[%c30] : memref<36xf32, #tpu.memory_space<smem>>
    %167 = vector.broadcast %166 : f32 to vector<8x128xf32>
    %168 = arith.mulf %167, %165 : vector<8x128xf32>
    %169 = arith.addf %163, %168 : vector<8x128xf32>
    %c127_i32_63 = arith.constant 127 : i32
    %170 = tpu.dynamic_rotate %165 by %c127_i32_63 dim 1 : vector<8x128xf32>, i32 -> vector<8x128xf32>
    %c31 = arith.constant 31 : index
    %171 = memref.load %arg2[%c31] : memref<36xf32, #tpu.memory_space<smem>>
    %172 = vector.broadcast %171 : f32 to vector<8x128xf32>
    %173 = arith.mulf %172, %170 : vector<8x128xf32>
    %174 = arith.addf %169, %173 : vector<8x128xf32>
    %c126_i32_64 = arith.constant 126 : i32
    %175 = tpu.dynamic_rotate %165 by %c126_i32_64 dim 1 : vector<8x128xf32>, i32 -> vector<8x128xf32>
    %c32 = arith.constant 32 : index
    %176 = memref.load %arg2[%c32] : memref<36xf32, #tpu.memory_space<smem>>
    %177 = vector.broadcast %176 : f32 to vector<8x128xf32>
    %178 = arith.mulf %177, %175 : vector<8x128xf32>
    %179 = arith.addf %174, %178 : vector<8x128xf32>
    %c0_65 = arith.constant 0 : index
    %c3_66 = arith.constant 3 : index
    %c2_67 = arith.constant 2 : index
    %c0_68 = arith.constant 0 : index
    %180 = vector.load %arg1[%c0_65, %c3_66, %c2_67, %c0_68] : memref<1x4x10x128xf32, #tpu.memory_space<vmem>>, vector<1x1x8x128xf32>
    %181 = vector.shape_cast %180 : vector<1x1x8x128xf32> to vector<8x128xf32>
    %c33 = arith.constant 33 : index
    %182 = memref.load %arg2[%c33] : memref<36xf32, #tpu.memory_space<smem>>
    %183 = vector.broadcast %182 : f32 to vector<8x128xf32>
    %184 = arith.mulf %183, %181 : vector<8x128xf32>
    %185 = arith.addf %179, %184 : vector<8x128xf32>
    %c127_i32_69 = arith.constant 127 : i32
    %186 = tpu.dynamic_rotate %181 by %c127_i32_69 dim 1 : vector<8x128xf32>, i32 -> vector<8x128xf32>
    %c34 = arith.constant 34 : index
    %187 = memref.load %arg2[%c34] : memref<36xf32, #tpu.memory_space<smem>>
    %188 = vector.broadcast %187 : f32 to vector<8x128xf32>
    %189 = arith.mulf %188, %186 : vector<8x128xf32>
    %190 = arith.addf %185, %189 : vector<8x128xf32>
    %c126_i32_70 = arith.constant 126 : i32
    %191 = tpu.dynamic_rotate %181 by %c126_i32_70 dim 1 : vector<8x128xf32>, i32 -> vector<8x128xf32>
    %c35 = arith.constant 35 : index
    %192 = memref.load %arg2[%c35] : memref<36xf32, #tpu.memory_space<smem>>
    %193 = vector.broadcast %192 : f32 to vector<8x128xf32>
    %194 = arith.mulf %193, %191 : vector<8x128xf32>
    %195 = arith.addf %190, %194 : vector<8x128xf32>
    %c0_71 = arith.constant 0 : index
    %c0_72 = arith.constant 0 : index
    %c0_73 = arith.constant 0 : index
    %196 = vector.load %arg4[%c0_71, %c0_72, %c0_73] : memref<1x8x128xf32, #tpu.memory_space<vmem>>, vector<1x8x128xf32>
    %197 = vector.shape_cast %196 : vector<1x8x128xf32> to vector<8x128xf32>
    %198 = vector.shape_cast %195 : vector<8x128xf32> to vector<1x8x128xf32>
    tpu.vector_store %arg4[%c0_71, %c0_72, %c0_73], %198 {strides = array<i32>} : memref<1x8x128xf32, #tpu.memory_space<vmem>>, vector<1x8x128xf32>,
    return
  }
  func.func @transform_0(%arg0: i32) -> (i32, i32, i32, i32) {
    %c0_i32 = arith.constant 0 : i32
    %c0_i32_0 = arith.constant 0 : i32
    %c0_i32_1 = arith.constant 0 : i32
    %c0_i32_2 = arith.constant 0 : i32
    return %arg0, %c0_i32, %c0_i32_0, %c0_i32_1 : i32, i32, i32, i32
  }
  func.func @transform_1(%arg0: i32) -> i32 {
    %c0_i32 = arith.constant 0 : i32
    %c0_i32_0 = arith.constant 0 : i32
    return %c0_i32 : i32
  }
  func.func @transform_2(%arg0: i32) -> i32 {
    %c0_i32 = arith.constant 0 : i32
    %c0_i32_0 = arith.constant 0 : i32
    return %c0_i32 : i32
  }
  func.func @transform_3(%arg0: i32) -> (i32, i32, i32) {
    %c0_i32 = arith.constant 0 : i32
    %c0_i32_0 = arith.constant 0 : i32
    %c0_i32_1 = arith.constant 0 : i32
    return %arg0, %c0_i32, %c0_i32_0 : i32, i32, i32
  }
}

</mosaic_0001>

<llo_original>
// kernel: tpu_custom_call.1
$region0: #{tpu_custom_call.1}
  #allocation0 [shape = 'u32[]', space=smem, size = 0x4, offset = 0x4, fixed_abs, tag = 'smem constant byte address 0x4 - core index']
  #allocation1 [shape = 'u32[144,128]{1,0:T(1,128)}', space=vmem, size = 0x12000, scoped, tag = 'internal scratch']
  #allocation2 [shape = 'f32[1]{0:T(128)S(6)}', space=smem, size = 0x200, scoped, tag = 'scoped memory for tpu_custom_call.1']
  %s0 = inlined_call_operand.vmem [shape: f32[1,4,10,128], index: 0, kind: input, shape index: {}]
  %s1 = inlined_call_operand.vmem [shape: f32[36], index: 1, kind: input, shape index: {}]
  %s2 = inlined_call_operand.<no memory space> [shape: f32[1], index: 2, kind: input, shape index: {}]
  %s3 = inlined_call_operand.hbm [shape: f32[1,8,128], index: 3, kind: output, shape index: {}]
  %s4 = sld [smem:[#allocation0]]
  $region26: #{tpu_custom_call.1} parent=0
    _
  %s6 = ssub.s32 1, %s4
  %s7 = scalar_select 0, %s6, %s4
  %8 = sst [smem:[#allocation2]] %s2
  $region1: #{tpu_custom_call.1} parent=0
    #allocation3 [shape = 'u8[512]{0}', space=smem, size = 0x200, scoped, tag = 'input window, operand 1, single buffered']
    #allocation4 [shape = 's32[1]{0}', space=sflag, size = 0x4, scoped, tag = 'scoped memory for tpu_custom_call.1']
    #allocation5 [shape = 's32[1]{0}', space=sflag, size = 0x4, scoped, tag = 'scoped memory for tpu_custom_call.1']
    #allocation6 [shape = 'u8[4096]{0}', space=vmem, size = 0x1000, scoped, tag = 'output window, operand 0, single buffered']
    %9 = vsyncpa [#allocation5], 0
    %10 = vsyncpa [#allocation4], 0
    // Predicated region
    $region2: #{tpu_custom_call.1} parent=1 // pred_check
      _
    $region3: #{tpu_custom_call.1} parent=1 // pred_check_branch
      %12 = sbr.rel (0) target = $region5
    $region4: #{tpu_custom_call.1} parent=1 // pred_region
      _
    $region5: #{tpu_custom_call.1} parent=1 // pred_fallthru
      _
    // Predicated region
    $region6: #{tpu_custom_call.1} parent=1 // pred_check
      _
    $region7: #{tpu_custom_call.1} parent=1 // pred_check_branch
      %14 = sbr.rel (0) target = $region9
    $region8: #{tpu_custom_call.1} parent=1 // pred_region
      %s16 = ssub.s32 16, 16
      %17 = vsyncadd [#allocation5], %s16
      %s19 = sshll.u32 %s1, 4
      %s20 = int_to_ptr.vmem [resolvable:$true] %s19
      %22 = dma.vmem_to_smem %s20, 16, [#allocation3], [#allocation5]
    $region9: #{tpu_custom_call.1} parent=1 // pred_fallthru
      _
    // Predicated region
    $region10: #{tpu_custom_call.1} parent=1 // pred_check
      _
    $region11: #{tpu_custom_call.1} parent=1 // pred_check_branch
      %24 = sbr.rel (0) target = $region13
    $region12: #{tpu_custom_call.1} parent=1 // pred_region
      _
    $region13: #{tpu_custom_call.1} parent=1 // pred_fallthru
      _
    // Predicated region
    $region14: #{tpu_custom_call.1} parent=1 // pred_check
      _
    $region15: #{tpu_custom_call.1} parent=1 // pred_check_branch
      %26 = sbr.rel (0) target = $region17
    $region16: #{tpu_custom_call.1} parent=1 // pred_region
      %27 = dma.done [#allocation5], 16
    $region17: #{tpu_custom_call.1} parent=1 // pred_fallthru
      _
    %28 = sfence
    %s29 = sld [smem:[#allocation2]]
    %v30 = vstv %s29
    %v31 = vadd.f32 %v30, 0.0
    %v32 = vld [vmem:[%s0] sm:$0xff]
    %s33 = sld [smem:[#allocation3]]
    %v34 = vstv %s33
    %v35 = vmul.f32 %v34, %v32
    %v36 = vadd.f32 %v31, %v35
    %37 = vrot.lane.b32.xlu0 %v32, 127
    %v38 = vpop.permute.xlu0 %37
    %s39 = sld [smem:[#allocation3 + $0x1]]
    %v40 = vstv %s39
    %v41 = vmul.f32 %v40, %v38
    %v42 = vadd.f32 %v36, %v41
    %43 = vrot.lane.b32.xlu0 %v32, 126
    %v44 = vpop.permute.xlu0 %43
    %s45 = sld [smem:[#allocation3 + $0x2]]
    %v46 = vstv %s45
    %v47 = vmul.f32 %v46, %v44
    %v48 = vadd.f32 %v42, %v47
    %v49 = vld [vmem:[%s0 + $0x1] sm:$0xff]
    %s50 = sld [smem:[#allocation3 + $0x3]]
    %v51 = vstv %s50
    %v52 = vmul.f32 %v51, %v49
    %v53 = vadd.f32 %v48, %v52
    %54 = vrot.lane.b32.xlu0 %v49, 127
    %v55 = vpop.permute.xlu0 %54
    %s56 = sld [smem:[#allocation3 + $0x4]]
    %v57 = vstv %s56
    %v58 = vmul.f32 %v57, %v55
    %v59 = vadd.f32 %v53, %v58
    %60 = vrot.lane.b32.xlu0 %v49, 126
    %v61 = vpop.permute.xlu0 %60
    %s62 = sld [smem:[#allocation3 + $0x5]]
    %v63 = vstv %s62
    %v64 = vmul.f32 %v63, %v61
    %v65 = vadd.f32 %v59, %v64
    %v66 = vld [vmem:[%s0 + $0x2] sm:$0xff]
    %s67 = sld [smem:[#allocation3 + $0x6]]
    %v68 = vstv %s67
    %v69 = vmul.f32 %v68, %v66
    %v70 = vadd.f32 %v65, %v69
    %71 = vrot.lane.b32.xlu0 %v66, 127
    %v72 = vpop.permute.xlu0 %71
    %s73 = sld [smem:[#allocation3 + $0x7]]
    %v74 = vstv %s73
    %v75 = vmul.f32 %v74, %v72
    %v76 = vadd.f32 %v70, %v75
    %77 = vrot.lane.b32.xlu0 %v66, 126
    %v78 = vpop.permute.xlu0 %77
    %s79 = sld [smem:[#allocation3 + $0x8]]
    %v80 = vstv %s79
    %v81 = vmul.f32 %v80, %v78
    %v82 = vadd.f32 %v76, %v81
    %s83 = scalar_lea.vmem %s0, 16
    %v84 = vld [vmem:[%s83] sm:$0xff]
    %s85 = sld [smem:[#allocation3 + $0x9]]
    %v86 = vstv %s85
    %v87 = vmul.f32 %v86, %v84
    %v88 = vadd.f32 %v82, %v87
    %89 = vrot.lane.b32.xlu0 %v84, 127
    %v90 = vpop.permute.xlu0 %89
    %s91 = sld [smem:[#allocation3 + $0xa]]
    %v92 = vstv %s91
    %v93 = vmul.f32 %v92, %v90
    %v94 = vadd.f32 %v88, %v93
    %95 = vrot.lane.b32.xlu0 %v84, 126
    %v96 = vpop.permute.xlu0 %95
    %s97 = sld [smem:[#allocation3 + $0xb]]
    %v98 = vstv %s97
    %v99 = vmul.f32 %v98, %v96
    %v100 = vadd.f32 %v94, %v99
    %v101 = vld [vmem:[%s83 + $0x1] sm:$0xff]
    %s102 = sld [smem:[#allocation3 + $0xc]]
    %v103 = vstv %s102
    %v104 = vmul.f32 %v103, %v101
    %v105 = vadd.f32 %v100, %v104
    %106 = vrot.lane.b32.xlu0 %v101, 127
    %v107 = vpop.permute.xlu0 %106
    %s108 = sld [smem:[#allocation3 + $0xd]]
    %v109 = vstv %s108
    %v110 = vmul.f32 %v109, %v107
    %v111 = vadd.f32 %v105, %v110
    %112 = vrot.lane.b32.xlu0 %v101, 126
    %v113 = vpop.permute.xlu0 %112
    %s114 = sld [smem:[#allocation3 + $0xe]]
    %v115 = vstv %s114
    %v116 = vmul.f32 %v115, %v113
    %v117 = vadd.f32 %v111, %v116
    %v118 = vld [vmem:[%s83 + $0x2] sm:$0xff]
    %s119 = sld [smem:[#allocation3 + $0xf]]
    %v120 = vstv %s119
    %v121 = vmul.f32 %v120, %v118
    %v122 = vadd.f32 %v117, %v121
    %123 = vrot.lane.b32.xlu0 %v118, 127
    %v124 = vpop.permute.xlu0 %123
    %s125 = sld [smem:[#allocation3 + $0x10]]
    %v126 = vstv %s125
    %v127 = vmul.f32 %v126, %v124
    %v128 = vadd.f32 %v122, %v127
    %129 = vrot.lane.b32.xlu0 %v118, 126
    %v130 = vpop.permute.xlu0 %129
    %s131 = sld [smem:[#allocation3 + $0x11]]
    %v132 = vstv %s131
    %v133 = vmul.f32 %v132, %v130
    %v134 = vadd.f32 %v128, %v133
    %s135 = scalar_lea.vmem %s0, 32
    %v136 = vld [vmem:[%s135] sm:$0xff]
    %s137 = sld [smem:[#allocation3 + $0x12]]
    %v138 = vstv %s137
    %v139 = vmul.f32 %v138, %v136
    %v140 = vadd.f32 %v134, %v139
    %141 = vrot.lane.b32.xlu0 %v136, 127
    %v142 = vpop.permute.xlu0 %141
    %s143 = sld [smem:[#allocation3 + $0x13]]
    %v144 = vstv %s143
    %v145 = vmul.f32 %v144, %v142
    %v146 = vadd.f32 %v140, %v145
    %147 = vrot.lane.b32.xlu0 %v136, 126
    %v148 = vpop.permute.xlu0 %147
    %s149 = sld [smem:[#allocation3 + $0x14]]
    %v150 = vstv %s149
    %v151 = vmul.f32 %v150, %v148
    %v152 = vadd.f32 %v146, %v151
    %v153 = vld [vmem:[%s135 + $0x1] sm:$0xff]
    %s154 = sld [smem:[#allocation3 + $0x15]]
    %v155 = vstv %s154
    %v156 = vmul.f32 %v155, %v153
    %v157 = vadd.f32 %v152, %v156
    %158 = vrot.lane.b32.xlu0 %v153, 127
    %v159 = vpop.permute.xlu0 %158
    %s160 = sld [smem:[#allocation3 + $0x16]]
    %v161 = vstv %s160
    %v162 = vmul.f32 %v161, %v159
    %v163 = vadd.f32 %v157, %v162
    %164 = vrot.lane.b32.xlu0 %v153, 126
    %v165 = vpop.permute.xlu0 %164
    %s166 = sld [smem:[#allocation3 + $0x17]]
    %v167 = vstv %s166
    %v168 = vmul.f32 %v167, %v165
    %v169 = vadd.f32 %v163, %v168
    %v170 = vld [vmem:[%s135 + $0x2] sm:$0xff]
    %s171 = sld [smem:[#allocation3 + $0x18]]
    %v172 = vstv %s171
    %v173 = vmul.f32 %v172, %v170
    %v174 = vadd.f32 %v169, %v173
    %175 = vrot.lane.b32.xlu0 %v170, 127
    %v176 = vpop.permute.xlu0 %175
    %s177 = sld [smem:[#allocation3 + $0x19]]
    %v178 = vstv %s177
    %v179 = vmul.f32 %v178, %v176
    %v180 = vadd.f32 %v174, %v179
    %181 = vrot.lane.b32.xlu0 %v170, 126
    %v182 = vpop.permute.xlu0 %181
    %s183 = sld [smem:[#allocation3 + $0x1a]]
    %v184 = vstv %s183
    %v185 = vmul.f32 %v184, %v182
    %v186 = vadd.f32 %v180, %v185
    %s187 = scalar_lea.vmem %s0, 48
    %v188 = vld [vmem:[%s187] sm:$0xff]
    %s189 = sld [smem:[#allocation3 + $0x1b]]
    %v190 = vstv %s189
    %v191 = vmul.f32 %v190, %v188
    %v192 = vadd.f32 %v186, %v191
    %193 = vrot.lane.b32.xlu0 %v188, 127
    %v194 = vpop.permute.xlu0 %193
    %s195 = sld [smem:[#allocation3 + $0x1c]]
    %v196 = vstv %s195
    %v197 = vmul.f32 %v196, %v194
    %v198 = vadd.f32 %v192, %v197
    %199 = vrot.lane.b32.xlu0 %v188, 126
    %v200 = vpop.permute.xlu0 %199
    %s201 = sld [smem:[#allocation3 + $0x1d]]
    %v202 = vstv %s201
    %v203 = vmul.f32 %v202, %v200
    %v204 = vadd.f32 %v198, %v203
    %v205 = vld [vmem:[%s187 + $0x1] sm:$0xff]
    %s206 = sld [smem:[#allocation3 + $0x1e]]
    %v207 = vstv %s206
    %v208 = vmul.f32 %v207, %v205
    %v209 = vadd.f32 %v204, %v208
    %210 = vrot.lane.b32.xlu0 %v205, 127
    %v211 = vpop.permute.xlu0 %210
    %s212 = sld [smem:[#allocation3 + $0x1f]]
    %v213 = vstv %s212
    %v214 = vmul.f32 %v213, %v211
    %v215 = vadd.f32 %v209, %v214
    %216 = vrot.lane.b32.xlu0 %v205, 126
    %v217 = vpop.permute.xlu0 %216
    %s218 = sld [smem:[#allocation3 + $0x20]]
    %v219 = vstv %s218
    %v220 = vmul.f32 %v219, %v217
    %v221 = vadd.f32 %v215, %v220
    %v222 = vld [vmem:[%s187 + $0x2] sm:$0xff]
    %s223 = sld [smem:[#allocation3 + $0x21]]
    %v224 = vstv %s223
    %v225 = vmul.f32 %v224, %v222
    %v226 = vadd.f32 %v221, %v225
    %227 = vrot.lane.b32.xlu0 %v222, 127
    %v228 = vpop.permute.xlu0 %227
    %s229 = sld [smem:[#allocation3 + $0x22]]
    %v230 = vstv %s229
    %v231 = vmul.f32 %v230, %v228
    %v232 = vadd.f32 %v226, %v231
    %233 = vrot.lane.b32.xlu0 %v222, 126
    %v234 = vpop.permute.xlu0 %233
    %s235 = sld [smem:[#allocation3 + $0x23]]
    %v236 = vstv %s235
    %v237 = vmul.f32 %v236, %v234
    %v238 = vadd.f32 %v232, %v237
    %239 = vst [vmem:[#allocation6] sm:$0xff] %v238
    // Predicated region
    $region18: #{tpu_custom_call.1} parent=1 // pred_check
      _
    $region19: #{tpu_custom_call.1} parent=1 // pred_check_branch
      %241 = sbr.rel (0) target = $region21
    $region20: #{tpu_custom_call.1} parent=1 // pred_region
      %s243 = ssub.s32 128, 128
      %244 = vsyncadd [#allocation4], %s243
      %s246 = sshll.u32 [#allocation6], 4
      %s247 = int_to_ptr.vmem [resolvable:$true] %s246
      %249 = dma.vmem_to_hbm [thread:$0]  %s247, 128, %s3, [#allocation4]
    $region21: #{tpu_custom_call.1} parent=1 // pred_fallthru
      _
    // Predicated region
    $region22: #{tpu_custom_call.1} parent=1 // pred_check
      _
    $region23: #{tpu_custom_call.1} parent=1 // pred_check_branch
      %251 = sbr.rel (0) target = $region25
    $region24: #{tpu_custom_call.1} parent=1 // pred_region
      %252 = dma.done [#allocation4], 128
    $region25: #{tpu_custom_call.1} parent=1 // pred_fallthru
      _
    %253 = vsyncpa [#allocation4], 1
    %254 = vsyncpa [#allocation5], 1

</llo_original>
